<compile_context>
chip_gen: v7x
topology: tpu7x:2x2x1
jax: 0.10.0
libtpu: 0.0.40
codegen_flags: <defaults>
</compile_context>

<pallas_src>
import jax
import jax.numpy as jnp
from jax.experimental import pallas as pl
from jax.experimental.pallas import tpu as pltpu

DTYPE = jnp.float32

_LANE = 128
_SUBLANE = 8
# Candidate lane-dense widths (all multiples of 128), widest first.
_WIDTH_CANDIDATES = (8192, 4096, 2048, 1024, 512, 256, 128)


def _chip_config():
    """Per-generation block budget (f32 elems), scoped-VMEM limit, min grid steps."""
    try:
        kind = jax.devices()[0].device_kind.lower()
    except Exception:  # pragma: no cover - defensive fallback
        kind = ""
    if "v7" in kind:
        # 64 MiB physical VMEM, ~3.2 TB/s HBM, 2 TensorCores.
        return {"block_elems": 1536 * 1024, "vmem_limit": 48 << 20, "min_steps": 4}
    if "v6" in kind:
        # 128 MiB physical VMEM, ~1.4 TB/s HBM, 1 TensorCore.
        return {"block_elems": 2048 * 1024, "vmem_limit": 64 << 20, "min_steps": 1}
    if "v5" in kind:
        # 128 MiB physical VMEM (16 MiB default scoped), ~0.82 TB/s HBM.
        return {"block_elems": 1024 * 1024, "vmem_limit": 32 << 20, "min_steps": 1}
    # Unknown generation: conservative settings that are legal everywhere.
    return {"block_elems": 1024 * 1024, "vmem_limit": 32 << 20, "min_steps": 2}


_CHIP_CFG = _chip_config()


def _add_one_kernel(x_ref, o_ref):
    # Elementwise hot path: output = float32(x) + 1.0 (in-kernel cast, so
    # bf16/f16/int8 inputs stream at their native width from HBM).
    o_ref[...] = x_ref[...].astype(DTYPE) + jnp.float32(1.0)


def _sublane_multiple(dtype) -> int:
    """Packed-sublane multiple for a dtype: 8 (32-bit), 16 (16-bit), 32 (8-bit)."""
    itemsize = max(1, jnp.dtype(dtype).itemsize)
    return _SUBLANE * max(1, 4 // itemsize)


def _run_add_one_2d(x2d: jax.Array, cfg) -> jax.Array:
    """+1 kernel on a lane-dense 2-D view (rows, width), width % 128 == 0."""
    rows, width = x2d.shape
    total_f32_bytes = rows * width * 4

    # Row tile sized by the per-chip block budget.
    tile_rows = max(1, cfg["block_elems"] // width)

    # On multi-TC chips keep >=min_steps grid steps for mid/large arrays so
    # the "parallel" grid axis actually shards across TensorCores.
    if cfg["min_steps"] > 1 and total_f32_bytes > (4 << 20):
        tile_rows = min(tile_rows, pl.cdiv(rows, cfg["min_steps"]))

    if tile_rows >= rows:
        tile_rows = rows  # full-extent block dim is always legal
    else:
        sub = _sublane_multiple(x2d.dtype)
        tile_rows = max(sub, (tile_rows // sub) * sub)

    grid = (pl.cdiv(rows, tile_rows),)

    return pl.pallas_call(
        _add_one_kernel,
        out_shape=jax.ShapeDtypeStruct((rows, width), DTYPE),
        grid_spec=pl.GridSpec(
            grid=grid,
            in_specs=[pl.BlockSpec((tile_rows, width), lambda i: (i, 0))],
            out_specs=pl.BlockSpec((tile_rows, width), lambda i: (i, 0)),
        ),
        compiler_params=pltpu.CompilerParams(
            dimension_semantics=("parallel",),
            vmem_limit_bytes=cfg["vmem_limit"],
        ),
    )(x2d)


def _run_add_one_1d(x1d: jax.Array, cfg) -> jax.Array:
    """+1 kernel on a ragged flat array; Pallas boundary masking handles the tail."""
    n = x1d.shape[0]

    blk = cfg["block_elems"]
    if cfg["min_steps"] > 1 and n * 4 > (4 << 20):
        blk = min(blk, pl.cdiv(n, cfg["min_steps"]))
    # Keep the block a multiple of 8*128*4 = 4096 so any dtype's packed layout
    # stays legal; the partial trailing block is boundary-masked.
    blk = max(4096, (min(blk, n) // 4096) * 4096)
    if blk >= n:
        blk = n  # small ragged input: single whole-extent block (always legal)

    grid = (pl.cdiv(n, blk),)

    return pl.pallas_call(
        _add_one_kernel,
        out_shape=jax.ShapeDtypeStruct((n,), DTYPE),
        grid_spec=pl.GridSpec(
            grid=grid,
            in_specs=[pl.BlockSpec((blk,), lambda i: (i,))],
            out_specs=pl.BlockSpec((blk,), lambda i: (i,)),
        ),
        compiler_params=pltpu.CompilerParams(
            dimension_semantics=("parallel",),
            vmem_limit_bytes=cfg["vmem_limit"],
        ),
    )(x1d)


def dispatch_micro(x: jax.Array) -> jax.Array:
    """output = zeros_like(x, float32); simple_tk.dispatch_micro(x, output) -> x + 1."""
    orig_shape = x.shape
    xf = x.reshape(-1)  # keep native dtype: the cast happens inside the kernel
    n = xf.shape[0]

    if n == 0:
        return jnp.zeros(orig_shape, DTYPE)

    cfg = _CHIP_CFG

    if n % _LANE == 0:
        # Lane-aligned (common case): zero-copy lane-dense 2-D view.
        width = next(w for w in _WIDTH_CANDIDATES if n % w == 0)
        out2d = _run_add_one_2d(xf.reshape(n // width, width), cfg)
        return out2d.reshape(orig_shape)

    # Ragged lane extent (rare): single blocked 1-D pass with boundary masking
    # instead of pad -> kernel -> trim.
    out1d = _run_add_one_1d(xf, cfg)
    return out1d.reshape(orig_shape)


# jit the wrapper so reshapes fuse and don't add extra HBM passes.
_dispatch_micro_jit = jax.jit(dispatch_micro)


class ModelNew:
    """JAX/Pallas equivalent of the PyTorch ModelNew module (no parameters)."""

    def __init__(self) -> None:
        pass  # module has no weights

    def __call__(self, x: jax.Array) -> jax.Array:
        # output = torch.zeros_like(x, dtype=float32); dispatch_micro(x, output)
        return _dispatch_micro_jit(x)


if __name__ == "__main__":
    key = jax.random.PRNGKey(0)
    # NCHW input, small shape: (batch=2, channels=4, H=16, W=16)
    x = jax.random.normal(key, (2, 4, 16, 16), dtype=DTYPE)

    model = ModelNew()
    out = model(x)
    out = jax.block_until_ready(out)

    # Sanity check against the reference semantics (x + 1, float32 output).
    expected = x.astype(DTYPE) + 1.0
    assert out.shape == x.shape and out.dtype == DTYPE
    assert jnp.max(jnp.abs(out - expected)) < 1e-6

    print("KERNEL_OK")
</pallas_src>

<mosaic_0001>
module attributes {stable_mosaic.version = 11 : i64} {
  func.func @_add_one_kernel(%arg0: i32, %arg1: memref<1x2048xf32, #tpu.memory_space<vmem>>, %arg2: memref<1x2048xf32, #tpu.memory_space<vmem>>) attributes {dimension_semantics = [#tpu.dimension_semantics<parallel>], iteration_bounds = array<i64: 1>, scalar_prefetch = 0 : i64, scratch_operands = 0 : i64, tpu.core_type = #tpu.core_type<tc>, window_params = [{transform_indices = @transform_0, window_bounds = array<i64: 1, 2048>}, {transform_indices = @transform_1, window_bounds = array<i64: 1, 2048>}]} {
    %c0 = arith.constant 0 : index
    %c0_0 = arith.constant 0 : index
    %0 = vector.load %arg1[%c0, %c0_0] : memref<1x2048xf32, #tpu.memory_space<vmem>>, vector<1x2048xf32>
    %cst = arith.constant 1.000000e+00 : f32
    %1 = vector.broadcast %cst : f32 to vector<1x2048xf32>
    %2 = arith.addf %0, %1 : vector<1x2048xf32>
    %c0_1 = arith.constant 0 : index
    %c0_2 = arith.constant 0 : index
    %3 = vector.load %arg2[%c0_1, %c0_2] : memref<1x2048xf32, #tpu.memory_space<vmem>>, vector<1x2048xf32>
    tpu.vector_store %arg2[%c0_1, %c0_2], %2 {strides = array<i32>} : memref<1x2048xf32, #tpu.memory_space<vmem>>, vector<1x2048xf32>,
    return
  }
  func.func @transform_0(%arg0: i32) -> (i32, i32) {
    %c0_i32 = arith.constant 0 : i32
    %c0_i32_0 = arith.constant 0 : i32
    return %arg0, %c0_i32 : i32, i32
  }
  func.func @transform_1(%arg0: i32) -> (i32, i32) {
    %c0_i32 = arith.constant 0 : i32
    %c0_i32_0 = arith.constant 0 : i32
    return %arg0, %c0_i32 : i32, i32
  }
}

</mosaic_0001>

<llo_original>
// kernel: dispatch_micro.1
$region0: #{dispatch_micro.1}
  #allocation0 [shape = 'u32[]', space=smem, size = 0x4, offset = 0x4, fixed_abs, tag = 'smem constant byte address 0x4 - core index']
  #allocation1 [shape = 'u32[144,128]{1,0:T(1,128)}', space=vmem, size = 0x12000, scoped, tag = 'internal scratch']
  %s0 = inlined_call_operand.vmem [shape: f32[1,2048], index: 0, kind: input, shape index: {}]
  %s1 = inlined_call_operand.vmem [shape: f32[1,2048], index: 1, kind: output, shape index: {}]
  %s2 = sld [smem:[#allocation0]]
  $region14: #{dispatch_micro.1} parent=0
    _
  %s4 = ssub.s32 1, %s2
  %s5 = scalar_select 0, %s4, %s2
  // Predicated region
  $region2: #{dispatch_micro.1} parent=0 // pred_check
    _
  $region3: #{dispatch_micro.1} parent=0 // pred_check_branch
    %7 = sbr.rel (0) target = $region5
  $region4: #{dispatch_micro.1} parent=0 // pred_region
    _
  $region5: #{dispatch_micro.1} parent=0 // pred_fallthru
    _
  %v8 = vld [vmem:[%s0] sm:$0xff]
  %v9 = vld [vmem:[%s0 + $0x8] sm:$0xff]
  %v10 = vadd.f32 %v8, 1.0
  %v11 = vadd.f32 %v9, 1.0
  %12 = vst [vmem:[%s1] sm:$0xff] %v10
  %13 = vst [vmem:[%s1 + $0x8] sm:$0xff] %v11
  // Predicated region
  $region6: #{dispatch_micro.1} parent=0 // pred_check
    _
  $region7: #{dispatch_micro.1} parent=0 // pred_check_branch
    %15 = sbr.rel (0) target = $region9
  $region8: #{dispatch_micro.1} parent=0 // pred_region
    _
  $region9: #{dispatch_micro.1} parent=0 // pred_fallthru
    _
  // Predicated region
  $region10: #{dispatch_micro.1} parent=0 // pred_check
    _
  $region11: #{dispatch_micro.1} parent=0 // pred_check_branch
    %17 = sbr.rel (0) target = $region13
  $region12: #{dispatch_micro.1} parent=0 // pred_region
    _
  $region13: #{dispatch_micro.1} parent=0 // pred_fallthru
    _

</llo_original>
